<compile_context>
chip_gen: v6e
topology: v6e:2x2x1
jax: 0.10.0
libtpu: 0.0.40
codegen_flags: <defaults>
</compile_context>

<pallas_src>
import functools

import jax
import jax.numpy as jnp
from jax.experimental import pallas as pl
from jax.experimental.pallas import tpu as pltpu

EPS = 1e-6
LANES = 128
SUBLANES = 8


def _charbonnier_kernel(x_ref, y_ref, o_ref, *, steps, tiles, full_rows,
                        lane_rem, masked_tail, has_phantom):
    # x_ref/y_ref : (tr, 128) tiles in the inputs' native dtype
    # o_ref       : (8, 128) f32 per-core partial-sum block, resident across axis 1
    c = pl.program_id(0)
    i = pl.program_id(1)
    t = c * steps + i            # global tile index (steps / tiles are static)
    tr = x_ref.shape[0]

    @pl.when(i == 0)
    def _init():
        o_ref[...] = jnp.zeros_like(o_ref)

    def accumulate(mask_tail):
        x = x_ref[...].astype(jnp.float32)
        y = y_ref[...].astype(jnp.float32)
        diff = x - y
        err = jnp.sqrt(diff * diff + jnp.float32(EPS))
        if mask_tail:
            # Only traced for the last (possibly partial) tile: row/lane index
            # mask covers both the Pallas partial trailing block (unspecified
            # data) and any wrapper-side 128-lane zero padding.  Row indices
            # stay < 2^24, so no int32 overflow regardless of n.
            row0 = t * tr
            g_row = jax.lax.broadcasted_iota(jnp.int32, (tr, LANES), 0) + row0
            valid = g_row < full_rows
            if lane_rem:
                lane = jax.lax.broadcasted_iota(jnp.int32, (tr, LANES), 1)
                valid = valid | ((g_row == full_rows) & (lane < lane_rem))
            err = jnp.where(valid, err, jnp.float32(0.0))
        # (8,128)-tile aligned fold into the resident output block: stays a
        # pure vreg-wise VPU tree-add (the reshape is tile aligned, no XLU /
        # VMEM temp expected).  Running f32 sums accumulate ~n/1024 terms per
        # lane slot; fine vs. an f32 reference at practical sizes.
        o_ref[...] += err.reshape(-1, SUBLANES, LANES).sum(axis=0)

    if masked_tail:
        if tiles > 1:
            @pl.when(t < tiles - 1)
            def _full():
                accumulate(False)

        @pl.when(t == tiles - 1)
        def _tail():
            accumulate(True)
        # phantom steps (t >= tiles) fall through: no accumulate at all.
    elif has_phantom:
        @pl.when(t < tiles)
        def _full():
            accumulate(False)
    else:
        accumulate(False)


def charbonnier_loss(x, y, *, tile_rows=None):
    assert x.shape == y.shape
    n = x.size
    assert n > 0

    itemsize = x.dtype.itemsize
    granule = SUBLANES * max(1, 4 // itemsize)   # 8 rows f32, 16 bf16, 32 int8

    # Lane-dense flatten; free (pure metadata) for contiguous inputs.
    xf = x.reshape(-1)
    yf = y.reshape(-1)

    lane_rem = n % LANES
    full_rows = n // LANES
    padded_rows = max(pl.cdiv(n, LANES), granule)
    padded_n = padded_rows * LANES
    if padded_n != n:
        # Rare path (ragged n or tiny input): pad only to the next 128-lane /
        # min-row boundary.  The common 128-aligned case never copies, and we
        # never pad to a whole-tile multiple (partial trailing blocks + the
        # gated in-kernel mask absorb the remainder instead).
        xf = jnp.pad(xf, (0, padded_n - n))
        yf = jnp.pad(yf, (0, padded_n - n))
    x2d = xf.reshape(padded_rows, LANES)
    y2d = yf.reshape(padded_rows, LANES)

    if tile_rows is None:
        # ~1 MiB per input block regardless of dtype (2048 rows f32, 4096 bf16):
        # 2 inputs x 2 pipeline buffers ~= 4 MiB + elementwise temps, well under
        # the default scoped VMEM on v5e/v6e/v7x, and large enough to amortize
        # the ~0.35us/step overhead even at v7x HBM bandwidth.
        tile_rows = (1 << 20) // (LANES * itemsize)
    tr = min(tile_rows, padded_rows)
    tr = max(granule, (tr // granule) * granule)

    tiles = pl.cdiv(padded_rows, tr)
    # Use both TensorCores (v7x) whenever there is more than one tile.  Odd
    # tile counts get one "phantom" step on the last core: its index_map is
    # clamped (no OOB block request, DMA revisits the previous block) and its
    # accumulate is skipped in-kernel.  Neutral on single-core v5e/v6e.
    ncores = 2 if tiles >= 2 else 1
    steps = pl.cdiv(tiles, ncores)
    has_phantom = ncores * steps > tiles
    masked_tail = (padded_rows % tr != 0) or (padded_n != n)

    if has_phantom:
        def in_map(c, i):
            return (jnp.minimum(c * steps + i, tiles - 1), 0)
    else:
        def in_map(c, i):
            return (c * steps + i, 0)

    kernel = functools.partial(
        _charbonnier_kernel, steps=steps, tiles=tiles, full_rows=full_rows,
        lane_rem=lane_rem, masked_tail=masked_tail, has_phantom=has_phantom)

    # TODO(synk): if profiling shows plain "parallel" does not shard grid axis 0
    # across v7x's two TensorCores, switch that axis to pltpu.CORE_PARALLEL.
    partials = pl.pallas_call(
        kernel,
        out_shape=jax.ShapeDtypeStruct((ncores * SUBLANES, LANES), jnp.float32),
        grid=(ncores, steps),
        in_specs=[pl.BlockSpec((tr, LANES), in_map),
                  pl.BlockSpec((tr, LANES), in_map)],
        out_specs=pl.BlockSpec((SUBLANES, LANES), lambda c, i: (c, 0)),
        compiler_params=pltpu.CompilerParams(
            dimension_semantics=("parallel", "arbitrary")),
    )(x2d, y2d)

    # Tiny epilogue: sum the per-core (8,128) partials, divide by true count.
    return jnp.sum(partials) / jnp.float32(n)


if __name__ == "__main__":
    key = jax.random.PRNGKey(0)
    kx, ky = jax.random.split(key)

    # Case 1: NCHW like the PyTorch module; n % 128 == 0 -> zero-copy fast path.
    shape = (2, 4, 16, 16)
    X = jax.random.normal(kx, shape, dtype=jnp.float32)
    Y = jax.random.normal(ky, shape, dtype=jnp.float32)
    loss = charbonnier_loss(X, Y)
    jax.block_until_ready(loss)
    ref = jnp.mean(jnp.sqrt((X - Y) ** 2 + EPS))
    assert jnp.allclose(loss, ref, rtol=1e-5, atol=1e-6), (loss, ref)

    # Case 2: ragged element count -> 128-lane pad + gated in-kernel tail mask.
    shape2 = (2, 3, 15, 17)
    X2 = jax.random.normal(kx, shape2, dtype=jnp.float32)
    Y2 = jax.random.normal(ky, shape2, dtype=jnp.float32)
    loss2 = charbonnier_loss(X2, Y2)
    jax.block_until_ready(loss2)
    ref2 = jnp.mean(jnp.sqrt((X2 - Y2) ** 2 + EPS))
    assert jnp.allclose(loss2, ref2, rtol=1e-5, atol=1e-6), (loss2, ref2)

    # Case 3: bf16 + odd tile count (small tile_rows) -> exercises the two-core
    # split with a phantom step and the partial trailing row-block.
    shape3 = (5, 8, 128)
    X3 = jax.random.normal(kx, shape3, dtype=jnp.float32).astype(jnp.bfloat16)
    Y3 = jax.random.normal(ky, shape3, dtype=jnp.float32).astype(jnp.bfloat16)
    loss3 = charbonnier_loss(X3, Y3, tile_rows=16)
    jax.block_until_ready(loss3)
    d3 = X3.astype(jnp.float32) - Y3.astype(jnp.float32)
    ref3 = jnp.mean(jnp.sqrt(d3 * d3 + EPS))
    assert jnp.allclose(loss3, ref3, rtol=1e-5, atol=1e-6), (loss3, ref3)

    print("KERNEL_OK")
</pallas_src>

<mosaic_0001>
module attributes {stable_mosaic.version = 11 : i64} {
  func.func @_charbonnier_kernel(%arg0: i32, %arg1: i32, %arg2: memref<16x128xf32, #tpu.memory_space<vmem>>, %arg3: memref<16x128xf32, #tpu.memory_space<vmem>>, %arg4: memref<8x128xf32, #tpu.memory_space<vmem>>) attributes {dimension_semantics = [#tpu.dimension_semantics<parallel>, #tpu.dimension_semantics<arbitrary>], iteration_bounds = array<i64: 1, 1>, scalar_prefetch = 0 : i64, scratch_operands = 0 : i64, tpu.core_type = #tpu.core_type<tc>, window_params = [{transform_indices = @transform_0, window_bounds = array<i64: 16, 128>}, {transform_indices = @transform_1, window_bounds = array<i64: 16, 128>}, {transform_indices = @transform_2, window_bounds = array<i64: 8, 128>}]} {
    %c0_i32 = arith.constant 0 : i32
    %0 = arith.cmpi eq, %arg1, %c0_i32 : i32
    %1 = arith.extui %0 : i1 to i32
    %c0_i32_0 = arith.constant 0 : i32
    %2 = arith.cmpi ne, %1, %c0_i32_0 : i32
    scf.if %2 {
      %cst_9 = arith.constant 0.000000e+00 : f32
      %15 = vector.broadcast %cst_9 : f32 to vector<8x128xf32>
      %c0_10 = arith.constant 0 : index
      %c0_11 = arith.constant 0 : index
      %16 = vector.load %arg4[%c0_10, %c0_11] : memref<8x128xf32, #tpu.memory_space<vmem>>, vector<8x128xf32>
      tpu.vector_store %arg4[%c0_10, %c0_11], %15 {strides = array<i32>} : memref<8x128xf32, #tpu.memory_space<vmem>>, vector<8x128xf32>,
    } else {
    }
    %c0 = arith.constant 0 : index
    %c0_1 = arith.constant 0 : index
    %3 = vector.load %arg2[%c0, %c0_1] : memref<16x128xf32, #tpu.memory_space<vmem>>, vector<16x128xf32>
    %c0_2 = arith.constant 0 : index
    %c0_3 = arith.constant 0 : index
    %4 = vector.load %arg3[%c0_2, %c0_3] : memref<16x128xf32, #tpu.memory_space<vmem>>, vector<16x128xf32>
    %5 = arith.subf %3, %4 : vector<16x128xf32>
    %6 = arith.mulf %5, %5 : vector<16x128xf32>
    %cst = arith.constant 9.99999997E-7 : f32
    %7 = vector.broadcast %cst : f32 to vector<16x128xf32>
    %8 = arith.addf %6, %7 : vector<16x128xf32>
    %9 = math.sqrt %8 : vector<16x128xf32>
    %c0_4 = arith.constant 0 : index
    %c0_5 = arith.constant 0 : index
    %10 = vector.load %arg4[%c0_4, %c0_5] : memref<8x128xf32, #tpu.memory_space<vmem>>, vector<8x128xf32>
    %11 = vector.shape_cast %9 : vector<16x128xf32> to vector<2x8x128xf32>
    %cst_6 = arith.constant dense<0.000000e+00> : vector<8x128xf32>
    %12 = vector.multi_reduction <add>, %11, %cst_6 [0] : vector<2x8x128xf32> to vector<8x128xf32>
    %13 = arith.addf %10, %12 : vector<8x128xf32>
    %c0_7 = arith.constant 0 : index
    %c0_8 = arith.constant 0 : index
    %14 = vector.load %arg4[%c0_7, %c0_8] : memref<8x128xf32, #tpu.memory_space<vmem>>, vector<8x128xf32>
    tpu.vector_store %arg4[%c0_7, %c0_8], %13 {strides = array<i32>} : memref<8x128xf32, #tpu.memory_space<vmem>>, vector<8x128xf32>,
    return
  }
  func.func @transform_0(%arg0: i32, %arg1: i32) -> (i32, i32) {
    %c1_i32 = arith.constant 1 : i32
    %0 = arith.muli %arg0, %c1_i32 : i32
    %1 = arith.addi %0, %arg1 : i32
    %c0_i32 = arith.constant 0 : i32
    %c0_i32_0 = arith.constant 0 : i32
    return %1, %c0_i32 : i32, i32
  }
  func.func @transform_1(%arg0: i32, %arg1: i32) -> (i32, i32) {
    %c1_i32 = arith.constant 1 : i32
    %0 = arith.muli %arg0, %c1_i32 : i32
    %1 = arith.addi %0, %arg1 : i32
    %c0_i32 = arith.constant 0 : i32
    %c0_i32_0 = arith.constant 0 : i32
    return %1, %c0_i32 : i32, i32
  }
  func.func @transform_2(%arg0: i32, %arg1: i32) -> (i32, i32) {
    %c0_i32 = arith.constant 0 : i32
    %c0_i32_0 = arith.constant 0 : i32
    return %arg0, %c0_i32 : i32, i32
  }
}

</mosaic_0001>

<llo_original>
// kernel: tpu_custom_call.1
$region0: #{tpu_custom_call.1}
  #allocation0 [shape = 'u32[]', space=smem, size = 0x4, offset = 0x4, fixed_abs, tag = 'smem constant byte address 0x4 - core index']
  #allocation1 [shape = 'u32[144,128]{1,0:T(1,128)}', space=vmem, size = 0x12000, scoped, tag = 'internal scratch']
  %s0 = inlined_call_operand.hbm [shape: f32[16,128], index: 0, kind: input, shape index: {}]
  %s1 = inlined_call_operand.hbm [shape: f32[16,128], index: 1, kind: input, shape index: {}]
  %s2 = inlined_call_operand.hbm [shape: f32[8,128], index: 2, kind: output, shape index: {}]
  %s3 = sld [smem:[#allocation0]]
  $region30: #{tpu_custom_call.1} parent=0
    _
  %s5 = ssub.s32 1, %s3
  %s6 = scalar_select 0, %s5, %s3
  $region1: #{tpu_custom_call.1} parent=0
    #allocation2 [shape = 'u8[8192]{0}', space=vmem, size = 0x2000, scoped, tag = 'input window, operand 0, single buffered']
    #allocation3 [shape = 's32[1]{0}', space=sflag, size = 0x4, scoped, tag = 'scoped memory for tpu_custom_call.1']
    #allocation4 [shape = 's32[1]{0}', space=sflag, size = 0x4, scoped, tag = 'scoped memory for tpu_custom_call.1']
    #allocation5 [shape = 'u8[8192]{0}', space=vmem, size = 0x2000, scoped, tag = 'input window, operand 1, single buffered']
    #allocation6 [shape = 's32[1]{0}', space=sflag, size = 0x4, scoped, tag = 'scoped memory for tpu_custom_call.1']
    #allocation7 [shape = 'u8[4096]{0}', space=vmem, size = 0x1000, scoped, tag = 'output window, operand 0, single buffered']
    %7 = vsyncpa [#allocation3], 0
    %8 = vsyncpa [#allocation6], 0
    %9 = vsyncpa [#allocation4], 0
    // Predicated region
    $region2: #{tpu_custom_call.1} parent=1 // pred_check
      _
    $region3: #{tpu_custom_call.1} parent=1 // pred_check_branch
      %11 = sbr.rel (0) target = $region5
    $region4: #{tpu_custom_call.1} parent=1 // pred_region
      %s12 = sadd.s32 0, 0
      %s13 = smul.u32 2, %s12
      %s15 = ssub.s32 256, 256
      %16 = vsyncadd [#allocation3], %s15
      %s17 = smul.addr %s13, 128
      %s18 = scalar_lea.hbm %s0, %s17
      %s19 = sshll.u32 [#allocation2], 4
      %s20 = int_to_ptr.vmem [resolvable:$true] %s19
      %25 = dma.hbm_to_vmem [thread:$0]  %s18, 256, %s20, [#allocation3], 128, 128, 8
    $region5: #{tpu_custom_call.1} parent=1 // pred_fallthru
      _
    // Predicated region
    $region6: #{tpu_custom_call.1} parent=1 // pred_check
      _
    $region7: #{tpu_custom_call.1} parent=1 // pred_check_branch
      %27 = sbr.rel (0) target = $region9
    $region8: #{tpu_custom_call.1} parent=1 // pred_region
      %s28 = sadd.s32 0, 0
      %s29 = smul.u32 2, %s28
      %s31 = ssub.s32 256, 256
      %32 = vsyncadd [#allocation6], %s31
      %s33 = smul.addr %s29, 128
      %s34 = scalar_lea.hbm %s1, %s33
      %s35 = sshll.u32 [#allocation5], 4
      %s36 = int_to_ptr.vmem [resolvable:$true] %s35
      %41 = dma.hbm_to_vmem [thread:$0]  %s34, 256, %s36, [#allocation6], 128, 128, 8
    $region9: #{tpu_custom_call.1} parent=1 // pred_fallthru
      _
    // Predicated region
    $region10: #{tpu_custom_call.1} parent=1 // pred_check
      _
    $region11: #{tpu_custom_call.1} parent=1 // pred_check_branch
      %43 = sbr.rel (0) target = $region13
    $region12: #{tpu_custom_call.1} parent=1 // pred_region
      %44 = dma.done [#allocation3], 256
    $region13: #{tpu_custom_call.1} parent=1 // pred_fallthru
      _
    // Predicated region
    $region14: #{tpu_custom_call.1} parent=1 // pred_check
      _
    $region15: #{tpu_custom_call.1} parent=1 // pred_check_branch
      %46 = sbr.rel (0) target = $region17
    $region16: #{tpu_custom_call.1} parent=1 // pred_region
      %47 = dma.done [#allocation6], 256
    $region17: #{tpu_custom_call.1} parent=1 // pred_fallthru
      _
    %s48 = sadd.s32 0, 0
    %s49 = smul.u32 2, %s48
    %s50 = sadd.s32 0, 0
    %s51 = smul.u32 2, %s50
    %p52 = scmp.eq.s32.totalorder 0, 0
    // Predicated region
    $region18: #{tpu_custom_call.1} parent=1 // pred_check
      %p53 = pneg %p52
    $region19: #{tpu_custom_call.1} parent=1 // pred_check_branch
      %55 = sbr.rel (%p53) target = $region21
    $region20: #{tpu_custom_call.1} parent=1 // pred_region
      %56 = vst [vmem:[#allocation7] sm:$0xff] 0.0
    $region21: #{tpu_custom_call.1} parent=1 // pred_fallthru
      _
    %v57 = vld [vmem:[#allocation2] sm:$0xff]
    %v58 = vld [vmem:[#allocation2 + $0x8] sm:$0xff]
    %v59 = vld [vmem:[#allocation5] sm:$0xff]
    %v60 = vld [vmem:[#allocation5 + $0x8] sm:$0xff]
    %v61 = vsub.f32 %v57, %v59
    %v62 = vsub.f32 %v58, %v60
    %v63 = vmul.f32 %v61, %v61
    %v64 = vmul.f32 %v62, %v62
    %v65 = vadd.f32 %v63, 1e-06
    %v66 = vadd.f32 %v64, 1e-06
    %v67 = vrsqrt.pop %v65
    %v68 = vmul.f32 %v65, %v67
    %vm69 = vcmp.eq.f32.partialorder %v65, inf
    %v70 = vsel %vm69, %v65, %v68
    %vm71 = vcmp.eq.f32.partialorder %v65, 0.0
    %v72 = vand.u32 %v65, 2147483648
    %v73 = vsel %vm71, %v72, %v70
    %v74 = vrsqrt.pop %v66
    %v75 = vmul.f32 %v66, %v74
    %vm76 = vcmp.eq.f32.partialorder %v66, inf
    %v77 = vsel %vm76, %v66, %v75
    %vm78 = vcmp.eq.f32.partialorder %v66, 0.0
    %v79 = vand.u32 %v66, 2147483648
    %v80 = vsel %vm78, %v79, %v77
    %v81 = vld [vmem:[#allocation7] sm:$0xff]
    %v82 = vadd.f32 %v73, %v80
    %v83 = vadd.f32 %v81, %v82
    %84 = vst [vmem:[#allocation7] sm:$0xff] %v83
    // Predicated region
    $region22: #{tpu_custom_call.1} parent=1 // pred_check
      _
    $region23: #{tpu_custom_call.1} parent=1 // pred_check_branch
      %86 = sbr.rel (0) target = $region25
    $region24: #{tpu_custom_call.1} parent=1 // pred_region
      %s88 = ssub.s32 128, 128
      %89 = vsyncadd [#allocation4], %s88
      %s91 = sshll.u32 [#allocation7], 4
      %s92 = int_to_ptr.vmem [resolvable:$true] %s91
      %94 = dma.vmem_to_hbm [thread:$0]  %s92, 128, %s2, [#allocation4]
    $region25: #{tpu_custom_call.1} parent=1 // pred_fallthru
      _
    // Predicated region
    $region26: #{tpu_custom_call.1} parent=1 // pred_check
      _
    $region27: #{tpu_custom_call.1} parent=1 // pred_check_branch
      %96 = sbr.rel (0) target = $region29
    $region28: #{tpu_custom_call.1} parent=1 // pred_region
      %97 = dma.done [#allocation4], 128
    $region29: #{tpu_custom_call.1} parent=1 // pred_fallthru
      _
    %98 = vsyncpa [#allocation3], 1
    %99 = vsyncpa [#allocation6], 1
    %100 = vsyncpa [#allocation4], 1

</llo_original>
